<compile_context>
chip_gen: v5e
topology: v5e:2x2
jax: 0.10.0
libtpu: 0.0.40
codegen_flags: <defaults>
</compile_context>

<pallas_src>
import functools

import jax
import jax.numpy as jnp
from jax import lax
from jax.experimental import pallas as pl
from jax.experimental.pallas import tpu as pltpu


def _sdpa_kernel(q_ref, k_ref, v_ref, out_ref, attn_ref, logits_ref, *,
                 inv_temp, bf16_matmul):
    # One grid step = one (batch, query-tile) pair; leading block dim is 1.
    # Fold the temperature into q: scales TQ*D elements instead of TQ*Lk logits.
    q = q_ref[0] * inv_temp      # (TQ, D)
    k = k_ref[0]                 # (Lk, D)
    v = v_ref[0]                 # (Lk, Dv)

    if bf16_matmul:
        q_mm, k_mm = q.astype(jnp.bfloat16), k.astype(jnp.bfloat16)
    else:
        q_mm, k_mm = q, k

    # logits = (q/temperature) @ k^T, contracting the last dims directly so the
    # MXU is fed NT-style without materializing a transposed copy of k.
    # (If a future Mosaic version emits a vxpose here, pre-transpose K once in
    #  the wrapper instead -- verify with pl.lower_as_mlir.)
    logits = lax.dot_general(
        q_mm, k_mm,
        dimension_numbers=(((1,), (1,)), ((), ())),
        preferred_element_type=jnp.float32,
    )  # (TQ, Lk) f32

    # Numerically stable softmax over the last axis (torch dim=2).  Exact
    # divide: the kernel is HBM-writeback bound so this costs nothing visible,
    # and rows sum to 1 at full f32 precision.
    m = jnp.max(logits, axis=-1, keepdims=True)
    e = jnp.exp(logits - m)
    denom = jnp.sum(e, axis=-1, keepdims=True)
    attn = e / denom             # (TQ, Lk) f32

    # output = attn @ v on the MXU with f32 accumulation.
    pv_dtype = jnp.bfloat16 if bf16_matmul else v.dtype
    out = jnp.dot(attn.astype(pv_dtype), v.astype(pv_dtype),
                  preferred_element_type=jnp.float32)

    logits_ref[0] = logits.astype(logits_ref.dtype)
    attn_ref[0] = attn.astype(attn_ref.dtype)
    out_ref[0] = out.astype(out_ref.dtype)


def _vmem_capacity_bytes():
    """Physical VMEM per TensorCore (128 MiB v5e/v6e, 64 MiB v7x)."""
    try:
        return int(pltpu.get_tpu_info().vmem_capacity_bytes)
    except Exception:
        return 64 * 1024 * 1024  # conservative floor (v7x per-TC)


def _per_step_vmem(tq, lk, d, dv, in_isz, out_isz, kv_buffers):
    """Live VMEM for one grid step with query tile `tq`."""
    q_bytes = 2 * tq * d * in_isz                       # Q double-buffered
    kv_bytes = kv_buffers * lk * (d + dv) * in_isz      # K+V (single/double buf)
    out_bytes = 2 * (tq * dv + 2 * tq * lk) * out_isz   # out/attn/logits blocks
    tmp_bytes = 3 * tq * lk * 4 + 4 * tq * 4            # f32 logits/e/attn + rows
    return q_bytes + kv_bytes + out_bytes + tmp_bytes


def _pick_query_tile(lq, lk, d, dv, in_isz, out_isz, budget, kv_buffers):
    """Largest tq in {512..8} dividing Lq whose footprint fits the budget."""
    candidates = [t for t in (512, 256, 128, 64, 32, 16, 8) if lq % t == 0]
    if not candidates:
        return lq  # ragged Lq: use the full extent (block == array dim is legal)
    for t in candidates:
        if _per_step_vmem(t, lk, d, dv, in_isz, out_isz, kv_buffers) <= budget:
            return t
    return candidates[-1]


def scaled_dot_product_attention(q, k, v, temperature, *, bf16_matmul=False):
    B, Lq, D = q.shape
    Bk, Lk, Dk = k.shape
    Bv, Lkv, Dv = v.shape
    assert (Bk, Dk) == (B, D) and (Bv, Lkv) == (B, Lk)

    in_isz = jnp.dtype(q.dtype).itemsize
    out_dtype = q.dtype          # never widen attn/logits beyond the input dtype
    out_isz = jnp.dtype(out_dtype).itemsize

    vmem_capacity = _vmem_capacity_bytes()
    vmem_limit = int(vmem_capacity * 0.8)    # never request more than the chip has
    tile_budget = int(vmem_capacity * 0.45)  # leave headroom for compiler scratch

    kernel = functools.partial(_sdpa_kernel,
                               inv_temp=1.0 / float(temperature),
                               bf16_matmul=bool(bf16_matmul))

    cost = pl.CostEstimate(
        flops=2 * B * Lq * Lk * (D + Dv),
        transcendentals=B * Lq * Lk,
        bytes_accessed=in_isz * B * (Lq * D + Lk * D + Lk * Dv)
        + out_isz * B * (Lq * Dv + 2 * Lq * Lk),
    )

    # v7x megacore: shard the *batch* axis across the 2 TensorCores so each core
    # fetches K/V for its own batches only; the query-tile axis stays sequential.
    dim_sem = ("parallel", "arbitrary") if B >= 2 else ("arbitrary", "parallel")

    def build(kv_buffer_count):
        tq = _pick_query_tile(Lq, Lk, D, Dv, in_isz, out_isz,
                              tile_budget, kv_buffer_count)
        n_q_tiles = Lq // tq

        if kv_buffer_count == 1:
            # K/V index_map is constant over the inner (query-tile) axis, so a
            # single buffer only stalls once per batch and halves K/V VMEM.
            def kv_spec(last):
                return pl.BlockSpec((1, Lk, last), lambda b, i: (b, 0, 0),
                                    pipeline_mode=pl.Buffered(1))
        else:
            def kv_spec(last):
                return pl.BlockSpec((1, Lk, last), lambda b, i: (b, 0, 0))

        grid_spec = pltpu.PrefetchScalarGridSpec(
            num_scalar_prefetch=0,
            grid=(B, n_q_tiles),
            in_specs=[
                pl.BlockSpec((1, tq, D), lambda b, i: (b, i, 0)),
                kv_spec(D),
                kv_spec(Dv),
            ],
            out_specs=[
                pl.BlockSpec((1, tq, Dv), lambda b, i: (b, i, 0)),
                pl.BlockSpec((1, tq, Lk), lambda b, i: (b, i, 0)),
                pl.BlockSpec((1, tq, Lk), lambda b, i: (b, i, 0)),
            ],
        )

        return pl.pallas_call(
            kernel,
            out_shape=(
                jax.ShapeDtypeStruct((B, Lq, Dv), out_dtype),   # output
                jax.ShapeDtypeStruct((B, Lq, Lk), out_dtype),   # attn
                jax.ShapeDtypeStruct((B, Lq, Lk), out_dtype),   # logits
            ),
            grid_spec=grid_spec,
            compiler_params=pltpu.CompilerParams(
                dimension_semantics=dim_sem,
                vmem_limit_bytes=vmem_limit,
            ),
            cost_estimate=cost,
        )

    try:
        return build(kv_buffer_count=1)(q, k, v)
    except Exception:
        # Compat fallback: if this JAX/Mosaic build rejects pl.Buffered(1) on a
        # pallas_call BlockSpec, degrade gracefully to default double-buffering.
        return build(kv_buffer_count=2)(q, k, v)


def _reference(q, k, v, temperature):
    logits = jnp.einsum("bqd,bkd->bqk", q, k) / temperature
    attn = jax.nn.softmax(logits, axis=-1)
    out = jnp.einsum("bqk,bkd->bqd", attn, v)
    return out, attn, logits


if __name__ == "__main__":
    key = jax.random.PRNGKey(0)
    kq, kk, kv = jax.random.split(key, 3)

    B, Lq, Lk, D, Dv = 2, 8, 8, 32, 32
    temperature = float(D) ** 0.5

    q = jax.random.normal(kq, (B, Lq, D), dtype=jnp.float32)
    k = jax.random.normal(kk, (B, Lk, D), dtype=jnp.float32)
    v = jax.random.normal(kv, (B, Lk, Dv), dtype=jnp.float32)

    out, attn, logits = scaled_dot_product_attention(q, k, v, temperature)
    jax.block_until_ready((out, attn, logits))

    # Correctness check against a pure-JAX reference.
    ref_out, ref_attn, ref_logits = _reference(q, k, v, temperature)
    assert jnp.allclose(logits, ref_logits, atol=1e-4, rtol=1e-4)
    assert jnp.allclose(attn, ref_attn, atol=1e-3, rtol=1e-3)
    assert jnp.allclose(out, ref_out, atol=1e-3, rtol=1e-3)

    print("KERNEL_OK")
</pallas_src>

<mosaic_0001>
module attributes {stable_mosaic.version = 11 : i64} {
  func.func @_sdpa_kernel(%arg0: i32, %arg1: i32, %arg2: memref<1x8x32xf32, #tpu.memory_space<vmem>>, %arg3: memref<1x8x32xf32, #tpu.memory_space<vmem>>, %arg4: memref<1x8x32xf32, #tpu.memory_space<vmem>>, %arg5: memref<1x8x32xf32, #tpu.memory_space<vmem>>, %arg6: memref<1x8x8xf32, #tpu.memory_space<vmem>>, %arg7: memref<1x8x8xf32, #tpu.memory_space<vmem>>) attributes {dimension_semantics = [#tpu.dimension_semantics<parallel>, #tpu.dimension_semantics<arbitrary>], iteration_bounds = array<i64: 2, 1>, scalar_prefetch = 0 : i64, scratch_operands = 0 : i64, tpu.core_type = #tpu.core_type<tc>, window_params = [{transform_indices = @transform_0, window_bounds = array<i64: 1, 8, 32>}, {pipeline_mode = #tpu.pipeline_mode<synchronous>, transform_indices = @transform_1, window_bounds = array<i64: 1, 8, 32>}, {pipeline_mode = #tpu.pipeline_mode<synchronous>, transform_indices = @transform_2, window_bounds = array<i64: 1, 8, 32>}, {transform_indices = @transform_3, window_bounds = array<i64: 1, 8, 32>}, {transform_indices = @transform_4, window_bounds = array<i64: 1, 8, 8>}, {transform_indices = @transform_5, window_bounds = array<i64: 1, 8, 8>}]} {
    %c0 = arith.constant 0 : index
    %c0_0 = arith.constant 0 : index
    %c0_1 = arith.constant 0 : index
    %0 = vector.load %arg2[%c0, %c0_0, %c0_1] : memref<1x8x32xf32, #tpu.memory_space<vmem>>, vector<1x8x32xf32>
    %1 = vector.shape_cast %0 : vector<1x8x32xf32> to vector<8x32xf32>
    %cst = arith.constant 0.176776692 : f32
    %2 = vector.broadcast %cst : f32 to vector<8x32xf32>
    %3 = arith.mulf %1, %2 : vector<8x32xf32>
    %c0_2 = arith.constant 0 : index
    %c0_3 = arith.constant 0 : index
    %c0_4 = arith.constant 0 : index
    %4 = vector.load %arg3[%c0_2, %c0_3, %c0_4] : memref<1x8x32xf32, #tpu.memory_space<vmem>>, vector<1x8x32xf32>
    %5 = vector.shape_cast %4 : vector<1x8x32xf32> to vector<8x32xf32>
    %c0_5 = arith.constant 0 : index
    %c0_6 = arith.constant 0 : index
    %c0_7 = arith.constant 0 : index
    %6 = vector.load %arg4[%c0_5, %c0_6, %c0_7] : memref<1x8x32xf32, #tpu.memory_space<vmem>>, vector<1x8x32xf32>
    %7 = vector.shape_cast %6 : vector<1x8x32xf32> to vector<8x32xf32>
    %cst_8 = arith.constant dense<0.000000e+00> : vector<8x8xf32>
    %8 = tpu.matmul %3, %5, %cst_8 {dimension_numbers = #tpu.dot_dimension_numbers<[1], [1], [0], [0], [0, 0, 1, 0], [], []>} : vector<8x32xf32>, vector<8x32xf32>, vector<8x8xf32> -> vector<8x8xf32>
    %cst_9 = arith.constant dense<0xFF800000> : vector<8xf32>
    %9 = vector.multi_reduction <maximumf>, %8, %cst_9 [1] : vector<8x8xf32> to vector<8xf32>
    %10 = vector.shape_cast %9 : vector<8xf32> to vector<8x1xf32>
    %11 = vector.broadcast %10 : vector<8x1xf32> to vector<8x8xf32>
    %12 = arith.subf %8, %11 : vector<8x8xf32>
    %13 = math.exp %12 : vector<8x8xf32>
    %cst_10 = arith.constant dense<0.000000e+00> : vector<8xf32>
    %14 = vector.multi_reduction <add>, %13, %cst_10 [1] : vector<8x8xf32> to vector<8xf32>
    %15 = vector.shape_cast %14 : vector<8xf32> to vector<8x1xf32>
    %16 = vector.broadcast %15 : vector<8x1xf32> to vector<8x8xf32>
    %17 = arith.divf %13, %16 : vector<8x8xf32>
    %cst_11 = arith.constant dense<0.000000e+00> : vector<8x32xf32>
    %18 = tpu.matmul %17, %7, %cst_11 {dimension_numbers = #tpu.dot_dimension_numbers<[1], [0], [0], [1], [0, 0, 1, 1], [], []>} : vector<8x8xf32>, vector<8x32xf32>, vector<8x32xf32> -> vector<8x32xf32>
    %c0_12 = arith.constant 0 : index
    %c0_13 = arith.constant 0 : index
    %c0_14 = arith.constant 0 : index
    %19 = vector.load %arg7[%c0_12, %c0_13, %c0_14] : memref<1x8x8xf32, #tpu.memory_space<vmem>>, vector<1x8x8xf32>
    %20 = vector.shape_cast %19 : vector<1x8x8xf32> to vector<8x8xf32>
    %21 = vector.shape_cast %8 : vector<8x8xf32> to vector<1x8x8xf32>
    tpu.vector_store %arg7[%c0_12, %c0_13, %c0_14], %21 {strides = array<i32>} : memref<1x8x8xf32, #tpu.memory_space<vmem>>, vector<1x8x8xf32>,
    %c0_15 = arith.constant 0 : index
    %c0_16 = arith.constant 0 : index
    %c0_17 = arith.constant 0 : index
    %22 = vector.load %arg6[%c0_15, %c0_16, %c0_17] : memref<1x8x8xf32, #tpu.memory_space<vmem>>, vector<1x8x8xf32>
    %23 = vector.shape_cast %22 : vector<1x8x8xf32> to vector<8x8xf32>
    %24 = vector.shape_cast %17 : vector<8x8xf32> to vector<1x8x8xf32>
    tpu.vector_store %arg6[%c0_15, %c0_16, %c0_17], %24 {strides = array<i32>} : memref<1x8x8xf32, #tpu.memory_space<vmem>>, vector<1x8x8xf32>,
    %c0_18 = arith.constant 0 : index
    %c0_19 = arith.constant 0 : index
    %c0_20 = arith.constant 0 : index
    %25 = vector.load %arg5[%c0_18, %c0_19, %c0_20] : memref<1x8x32xf32, #tpu.memory_space<vmem>>, vector<1x8x32xf32>
    %26 = vector.shape_cast %25 : vector<1x8x32xf32> to vector<8x32xf32>
    %27 = vector.shape_cast %18 : vector<8x32xf32> to vector<1x8x32xf32>
    tpu.vector_store %arg5[%c0_18, %c0_19, %c0_20], %27 {strides = array<i32>} : memref<1x8x32xf32, #tpu.memory_space<vmem>>, vector<1x8x32xf32>,
    return
  }
  func.func @transform_0(%arg0: i32, %arg1: i32) -> (i32, i32, i32) {
    %c0_i32 = arith.constant 0 : i32
    %c0_i32_0 = arith.constant 0 : i32
    return %arg0, %arg1, %c0_i32 : i32, i32, i32
  }
  func.func @transform_1(%arg0: i32, %arg1: i32) -> (i32, i32, i32) {
    %c0_i32 = arith.constant 0 : i32
    %c0_i32_0 = arith.constant 0 : i32
    %c0_i32_1 = arith.constant 0 : i32
    return %arg0, %c0_i32, %c0_i32_0 : i32, i32, i32
  }
  func.func @transform_2(%arg0: i32, %arg1: i32) -> (i32, i32, i32) {
    %c0_i32 = arith.constant 0 : i32
    %c0_i32_0 = arith.constant 0 : i32
    %c0_i32_1 = arith.constant 0 : i32
    return %arg0, %c0_i32, %c0_i32_0 : i32, i32, i32
  }
  func.func @transform_3(%arg0: i32, %arg1: i32) -> (i32, i32, i32) {
    %c0_i32 = arith.constant 0 : i32
    %c0_i32_0 = arith.constant 0 : i32
    return %arg0, %arg1, %c0_i32 : i32, i32, i32
  }
  func.func @transform_4(%arg0: i32, %arg1: i32) -> (i32, i32, i32) {
    %c0_i32 = arith.constant 0 : i32
    %c0_i32_0 = arith.constant 0 : i32
    return %arg0, %arg1, %c0_i32 : i32, i32, i32
  }
  func.func @transform_5(%arg0: i32, %arg1: i32) -> (i32, i32, i32) {
    %c0_i32 = arith.constant 0 : i32
    %c0_i32_0 = arith.constant 0 : i32
    return %arg0, %arg1, %c0_i32 : i32, i32, i32
  }
}

module attributes {stable_mosaic.version = 11 : i64} {
  func.func @_sdpa_kernel(%arg0: i32, %arg1: i32, %arg2: memref<1x8x32xf32, #tpu.memory_space<vmem>>, %arg3: memref<1x8x32xf32, #tpu.memory_space<vmem>>, %arg4: memref<1x8x32xf32, #tpu.memory_space<vmem>>, %arg5: memref<1x8x32xf32, #tpu.memory_space<vmem>>, %arg6: memref<1x8x8xf32, #tpu.memory_space<vmem>>, %arg7: memref<1x8x8xf32, #tpu.memory_space<vmem>>) attributes {dimension_semantics = [#tpu.dimension_semantics<parallel>, #tpu.dimension_semantics<arbitrary>], iteration_bounds = array<i64: 2, 1>, scalar_prefetch = 0 : i64, scratch_operands = 0 : i64, tpu.core_type = #tpu.core_type<tc>, window_params = [{transform_indices = @transform_0, window_bounds = array<i64: 1, 8, 32>}, {transform_indices = @transform_1, window_bounds = array<i64: 1, 8, 32>}, {transform_indices = @transform_2, window_bounds = array<i64: 1, 8, 32>}, {transform_indices = @transform_3, window_bounds = array<i64: 1, 8, 32>}, {transform_indices = @transform_4, window_bounds = array<i64: 1, 8, 8>}, {transform_indices = @transform_5, window_bounds = array<i64: 1, 8, 8>}]} {
    %c0 = arith.constant 0 : index
    %c0_0 = arith.constant 0 : index
    %c0_1 = arith.constant 0 : index
    %0 = vector.load %arg2[%c0, %c0_0, %c0_1] : memref<1x8x32xf32, #tpu.memory_space<vmem>>, vector<1x8x32xf32>
    %1 = vector.shape_cast %0 : vector<1x8x32xf32> to vector<8x32xf32>
    %cst = arith.constant 0.176776692 : f32
    %2 = vector.broadcast %cst : f32 to vector<8x32xf32>
    %3 = arith.mulf %1, %2 : vector<8x32xf32>
    %c0_2 = arith.constant 0 : index
    %c0_3 = arith.constant 0 : index
    %c0_4 = arith.constant 0 : index
    %4 = vector.load %arg3[%c0_2, %c0_3, %c0_4] : memref<1x8x32xf32, #tpu.memory_space<vmem>>, vector<1x8x32xf32>
    %5 = vector.shape_cast %4 : vector<1x8x32xf32> to vector<8x32xf32>
    %c0_5 = arith.constant 0 : index
    %c0_6 = arith.constant 0 : index
    %c0_7 = arith.constant 0 : index
    %6 = vector.load %arg4[%c0_5, %c0_6, %c0_7] : memref<1x8x32xf32, #tpu.memory_space<vmem>>, vector<1x8x32xf32>
    %7 = vector.shape_cast %6 : vector<1x8x32xf32> to vector<8x32xf32>
    %cst_8 = arith.constant dense<0.000000e+00> : vector<8x8xf32>
    %8 = tpu.matmul %3, %5, %cst_8 {dimension_numbers = #tpu.dot_dimension_numbers<[1], [1], [0], [0], [0, 0, 1, 0], [], []>} : vector<8x32xf32>, vector<8x32xf32>, vector<8x8xf32> -> vector<8x8xf32>
    %cst_9 = arith.constant dense<0xFF800000> : vector<8xf32>
    %9 = vector.multi_reduction <maximumf>, %8, %cst_9 [1] : vector<8x8xf32> to vector<8xf32>
    %10 = vector.shape_cast %9 : vector<8xf32> to vector<8x1xf32>
    %11 = vector.broadcast %10 : vector<8x1xf32> to vector<8x8xf32>
    %12 = arith.subf %8, %11 : vector<8x8xf32>
    %13 = math.exp %12 : vector<8x8xf32>
    %cst_10 = arith.constant dense<0.000000e+00> : vector<8xf32>
    %14 = vector.multi_reduction <add>, %13, %cst_10 [1] : vector<8x8xf32> to vector<8xf32>
    %15 = vector.shape_cast %14 : vector<8xf32> to vector<8x1xf32>
    %16 = vector.broadcast %15 : vector<8x1xf32> to vector<8x8xf32>
    %17 = arith.divf %13, %16 : vector<8x8xf32>
    %cst_11 = arith.constant dense<0.000000e+00> : vector<8x32xf32>
    %18 = tpu.matmul %17, %7, %cst_11 {dimension_numbers = #tpu.dot_dimension_numbers<[1], [0], [0], [1], [0, 0, 1, 1], [], []>} : vector<8x8xf32>, vector<8x32xf32>, vector<8x32xf32> -> vector<8x32xf32>
    %c0_12 = arith.constant 0 : index
    %c0_13 = arith.constant 0 : index
    %c0_14 = arith.constant 0 : index
    %19 = vector.load %arg7[%c0_12, %c0_13, %c0_14] : memref<1x8x8xf32, #tpu.memory_space<vmem>>, vector<1x8x8xf32>
    %20 = vector.shape_cast %19 : vector<1x8x8xf32> to vector<8x8xf32>
    %21 = vector.shape_cast %8 : vector<8x8xf32> to vector<1x8x8xf32>
    tpu.vector_store %arg7[%c0_12, %c0_13, %c0_14], %21 {strides = array<i32>} : memref<1x8x8xf32, #tpu.memory_space<vmem>>, vector<1x8x8xf32>,
    %c0_15 = arith.constant 0 : index
    %c0_16 = arith.constant 0 : index
    %c0_17 = arith.constant 0 : index
    %22 = vector.load %arg6[%c0_15, %c0_16, %c0_17] : memref<1x8x8xf32, #tpu.memory_space<vmem>>, vector<1x8x8xf32>
    %23 = vector.shape_cast %22 : vector<1x8x8xf32> to vector<8x8xf32>
    %24 = vector.shape_cast %17 : vector<8x8xf32> to vector<1x8x8xf32>
    tpu.vector_store %arg6[%c0_15, %c0_16, %c0_17], %24 {strides = array<i32>} : memref<1x8x8xf32, #tpu.memory_space<vmem>>, vector<1x8x8xf32>,
    %c0_18 = arith.constant 0 : index
    %c0_19 = arith.constant 0 : index
    %c0_20 = arith.constant 0 : index
    %25 = vector.load %arg5[%c0_18, %c0_19, %c0_20] : memref<1x8x32xf32, #tpu.memory_space<vmem>>, vector<1x8x32xf32>
    %26 = vector.shape_cast %25 : vector<1x8x32xf32> to vector<8x32xf32>
    %27 = vector.shape_cast %18 : vector<8x32xf32> to vector<1x8x32xf32>
    tpu.vector_store %arg5[%c0_18, %c0_19, %c0_20], %27 {strides = array<i32>} : memref<1x8x32xf32, #tpu.memory_space<vmem>>, vector<1x8x32xf32>,
    return
  }
  func.func @transform_0(%arg0: i32, %arg1: i32) -> (i32, i32, i32) {
    %c0_i32 = arith.constant 0 : i32
    %c0_i32_0 = arith.constant 0 : i32
    return %arg0, %arg1, %c0_i32 : i32, i32, i32
  }
  func.func @transform_1(%arg0: i32, %arg1: i32) -> (i32, i32, i32) {
    %c0_i32 = arith.constant 0 : i32
    %c0_i32_0 = arith.constant 0 : i32
    %c0_i32_1 = arith.constant 0 : i32
    return %arg0, %c0_i32, %c0_i32_0 : i32, i32, i32
  }
  func.func @transform_2(%arg0: i32, %arg1: i32) -> (i32, i32, i32) {
    %c0_i32 = arith.constant 0 : i32
    %c0_i32_0 = arith.constant 0 : i32
    %c0_i32_1 = arith.constant 0 : i32
    return %arg0, %c0_i32, %c0_i32_0 : i32, i32, i32
  }
  func.func @transform_3(%arg0: i32, %arg1: i32) -> (i32, i32, i32) {
    %c0_i32 = arith.constant 0 : i32
    %c0_i32_0 = arith.constant 0 : i32
    return %arg0, %arg1, %c0_i32 : i32, i32, i32
  }
  func.func @transform_4(%arg0: i32, %arg1: i32) -> (i32, i32, i32) {
    %c0_i32 = arith.constant 0 : i32
    %c0_i32_0 = arith.constant 0 : i32
    return %arg0, %arg1, %c0_i32 : i32, i32, i32
  }
  func.func @transform_5(%arg0: i32, %arg1: i32) -> (i32, i32, i32) {
    %c0_i32 = arith.constant 0 : i32
    %c0_i32_0 = arith.constant 0 : i32
    return %arg0, %arg1, %c0_i32 : i32, i32, i32
  }
}

</mosaic_0001>

<llo_original>
// kernel: tpu_custom_call.1
$region0: #{tpu_custom_call.1}
  #allocation0 [shape = 'u32[]', space=smem, size = 0x4, offset = 0x4, fixed_abs, tag = 'smem constant byte address 0x4 - core index']
  #allocation1 [shape = 'u32[72,128]{1,0:T(1,128)}', space=vmem, size = 0x9000, scoped, tag = 'internal scratch']
  %s0 = inlined_call_operand.hbm [shape: f32[2,8,32], index: 0, kind: input, shape index: {}]
  %s1 = inlined_call_operand.hbm [shape: f32[2,8,32], index: 1, kind: input, shape index: {}]
  %s2 = inlined_call_operand.hbm [shape: f32[2,8,32], index: 2, kind: input, shape index: {}]
  %s3 = inlined_call_operand.hbm [shape: f32[2,8,32], index: 3, kind: output, shape index: {0}]
  %s4 = inlined_call_operand.hbm [shape: f32[2,8,8], index: 4, kind: output, shape index: {1}]
  %s5 = inlined_call_operand.hbm [shape: f32[2,8,8], index: 5, kind: output, shape index: {2}]
  %6 = xla_tuple %s3, %s4, %s5
  %s7 = sld [smem:[#allocation0]]
  $region73: #{tpu_custom_call.1} parent=0
    _
  %s9 = ssub.s32 1, %s7
  %s10 = scalar_select 0, %s9, %s7
  $region1: #{tpu_custom_call.1} parent=0
    #allocation2 [shape = 'u8[8192]{0}', space=vmem, size = 0x2000, scoped, tag = 'input window, operand 0']
    #allocation3 [shape = 's32[2]{0}', space=sflag, size = 0x8, scoped, tag = 'scoped memory for tpu_custom_call.1']
    #allocation4 [shape = 's32[2]{0}', space=sflag, size = 0x8, scoped, tag = 'scoped memory for tpu_custom_call.1']
    #allocation5 [shape = 'u8[4096]{0}', space=vmem, size = 0x1000, scoped, tag = 'input window, operand 1, single buffered']
    #allocation6 [shape = 's32[1]{0}', space=sflag, size = 0x4, scoped, tag = 'scoped memory for tpu_custom_call.1']
    #allocation7 [shape = 'u8[4096]{0}', space=vmem, size = 0x1000, scoped, tag = 'input window, operand 2, single buffered']
    #allocation8 [shape = 'u8[8192]{0}', space=vmem, size = 0x2000, scoped, tag = 'output window, operand 0']
    #allocation9 [shape = 'u8[8192]{0}', space=vmem, size = 0x2000, scoped, tag = 'output window, operand 1']
    #allocation10 [shape = 's32[2]{0}', space=sflag, size = 0x8, scoped, tag = 'scoped memory for tpu_custom_call.1']
    #allocation11 [shape = 'u8[8192]{0}', space=vmem, size = 0x2000, scoped, tag = 'output window, operand 2']
    %11 = vsyncpa [#allocation3], 0
    %s12 = scalar_lea.sflag [#allocation3], 1
    %13 = vsyncpa %s12, 0
    %14 = vsyncpa [#allocation6], 0
    %15 = vsyncpa [#allocation4], 0
    %s16 = scalar_lea.sflag [#allocation4], 1
    %17 = vsyncpa %s16, 0
    %18 = vsyncpa [#allocation10], 0
    %s19 = scalar_lea.sflag [#allocation10], 1
    %20 = vsyncpa %s19, 0
    loop: start=0, step=1, limit=4
    $region2: #{tpu_custom_call.1} parent=1 // loop_pre_header
      _
    $region3: #{tpu_custom_call.1} parent=1 // loop_header
      %s22 = sphi 0, %s26
      %p23 = scmp.ge.s32.totalorder %s22, 4
      %s29 = sphi 0, %s41
      %s30 = sphi 0, %s37
      %s31 = sphi 0, %s29
      %s32 = sphi 0, %s30
      %s33 = sphi 0, %s31
      %s34 = sphi 0, %s32
      %s46 = sphi 0, %s48
      %s49 = sphi 0, %s46
      %s50 = sphi 0, %s49
      %s66 = sphi 0, %s50
      %s72 = sphi 0, %s74
      %s75 = sphi 0, %s72
      %s76 = sphi 0, %s75
      %s92 = sphi 0, %s76
      %s98 = sphi 0, %s100
      %s101 = sphi 0, %s98
      %s102 = sphi 0, %s101
      %s118 = sphi 0, %s102
      %s126 = sphi 0, %s128
      %s129 = sphi 0, %s126
      %s130 = sphi 0, %s129
      %s146 = sphi 0, %s130
      %s154 = sphi 0, %s156
      %s157 = sphi 0, %s154
      %s158 = sphi 0, %s157
      %s174 = sphi 0, %s158
      %s182 = sphi 0, %s184
      %s185 = sphi 0, %s182
      %s186 = sphi 0, %s185
      %s202 = sphi 0, %s186
    $region4: #{tpu_custom_call.1} parent=1 // loop_header_branch
      %25 = sbr.rel (%p23) target = $region8
    $region5: #{tpu_custom_call.1} parent=1 // loop_body
      %s27 = ssub.s32 %s22, 1
      %s28 = ssub.s32 %s22, 2
      %s35 = sadd.s32 1, %s30
      %p36 = scmp.ge.s32.totalorder %s35, 1
      %s37 = scalar_select %p36, 0, %s35
      %s38 = sadd.s32 1, %s29
      %s39 = scalar_select %p36, %s38, %s29
      %p40 = scmp.ge.s32.totalorder %s39, 2
      %s41 = scalar_select %p40, 0, %s39
      %s42 = ssub.s32 %s29, %s41
      %s43 = ssub.s32 %s30, %s37
      %s44 = sor.u32 %s42, %s43
      %p45 = scmp.eq.s32.totalorder %s44, 0
      %s47 = sadd.s32 %s46, 1
      %s48 = scalar_select %p45, %s46, %s47
      %p51 = pneg %p45
      %p52 = scmp.eq.s32.totalorder %s22, 1
      %p53 = por %p51, %p52
      %p54 = scmp.ne.s32.totalorder %s46, %s49
      %p55 = scmp.eq.s32.totalorder %s22, 0
      %p56 = por %p54, %p55
      %p57 = scmp.ne.s32.totalorder %s46, %s49
      %p58 = scmp.eq.s32.totalorder %s27, 1
      %p59 = por %p57, %p58
      %p60 = scmp.ne.s32.totalorder %s49, %s50
      %p61 = scmp.eq.s32.totalorder %s27, 0
      %p62 = por %p60, %p61
      %p63 = scmp.ne.s32.totalorder %s49, %s50
      %p64 = scmp.eq.s32.totalorder %s28, 1
      %p65 = por %p63, %p64
      %p67 = scmp.ne.s32.totalorder %s50, %s66
      %p68 = scmp.eq.s32.totalorder %s28, 0
      %p69 = por %p67, %p68
      %s70 = ssub.s32 %s29, %s41
      %p71 = scmp.eq.s32.totalorder %s70, 0
      %s73 = sadd.s32 %s72, 1
      %s74 = scalar_select %p71, %s72, %s73
      %p77 = pneg %p71
      %p78 = scmp.eq.s32.totalorder %s22, 1
      %p79 = por %p77, %p78
      %p80 = scmp.ne.s32.totalorder %s72, %s75
      %p81 = scmp.eq.s32.totalorder %s22, 0
      %p82 = por %p80, %p81
      %p83 = scmp.ne.s32.totalorder %s72, %s75
      %p84 = scmp.eq.s32.totalorder %s27, 1
      %p85 = por %p83, %p84
      %p86 = scmp.ne.s32.totalorder %s75, %s76
      %p87 = scmp.eq.s32.totalorder %s27, 0
      %p88 = por %p86, %p87
      %p89 = scmp.ne.s32.totalorder %s75, %s76
      %p90 = scmp.eq.s32.totalorder %s28, 1
      %p91 = por %p89, %p90
      %p93 = scmp.ne.s32.totalorder %s76, %s92
      %p94 = scmp.eq.s32.totalorder %s28, 0
      %p95 = por %p93, %p94
      %s96 = ssub.s32 %s29, %s41
      %p97 = scmp.eq.s32.totalorder %s96, 0
      %s99 = sadd.s32 %s98, 1
      %s100 = scalar_select %p97, %s98, %s99
      %p103 = pneg %p97
      %p104 = scmp.eq.s32.totalorder %s22, 1
      %p105 = por %p103, %p104
      %p106 = scmp.ne.s32.totalorder %s98, %s101
      %p107 = scmp.eq.s32.totalorder %s22, 0
      %p108 = por %p106, %p107
      %p109 = scmp.ne.s32.totalorder %s98, %s101
      %p110 = scmp.eq.s32.totalorder %s27, 1
      %p111 = por %p109, %p110
      %p112 = scmp.ne.s32.totalorder %s101, %s102
      %p113 = scmp.eq.s32.totalorder %s27, 0
      %p114 = por %p112, %p113
      %p115 = scmp.ne.s32.totalorder %s101, %s102
      %p116 = scmp.eq.s32.totalorder %s28, 1
      %p117 = por %p115, %p116
      %p119 = scmp.ne.s32.totalorder %s102, %s118
      %p120 = scmp.eq.s32.totalorder %s28, 0
      %p121 = por %p119, %p120
      %s122 = ssub.s32 %s29, %s41
      %s123 = ssub.s32 %s30, %s37
      %s124 = sor.u32 %s122, %s123
      %p125 = scmp.eq.s32.totalorder %s124, 0
      %s127 = sadd.s32 %s126, 1
      %s128 = scalar_select %p125, %s126, %s127
      %p131 = pneg %p125
      %p132 = scmp.eq.s32.totalorder %s22, 1
      %p133 = por %p131, %p132
      %p134 = scmp.ne.s32.totalorder %s126, %s129
      %p135 = scmp.eq.s32.totalorder %s22, 0
      %p136 = por %p134, %p135
      %p137 = scmp.ne.s32.totalorder %s126, %s129
      %p138 = scmp.eq.s32.totalorder %s27, 1
      %p139 = por %p137, %p138
      %p140 = scmp.ne.s32.totalorder %s129, %s130
      %p141 = scmp.eq.s32.totalorder %s27, 0
      %p142 = por %p140, %p141
      %p143 = scmp.ne.s32.totalorder %s129, %s130
      %p144 = scmp.eq.s32.totalorder %s28, 1
      %p145 = por %p143, %p144
      %p147 = scmp.ne.s32.totalorder %s130, %s146
      %p148 = scmp.eq.s32.totalorder %s28, 0
      %p149 = por %p147, %p148
      %s150 = ssub.s32 %s29, %s41
      %s151 = ssub.s32 %s30, %s37
      %s152 = sor.u32 %s150, %s151
      %p153 = scmp.eq.s32.totalorder %s152, 0
      %s155 = sadd.s32 %s154, 1
      %s156 = scalar_select %p153, %s154, %s155
      %p159 = pneg %p153
      %p160 = scmp.eq.s32.totalorder %s22, 1
      %p161 = por %p159, %p160
      %p162 = scmp.ne.s32.totalorder %s154, %s157
      %p163 = scmp.eq.s32.totalorder %s22, 0
      %p164 = por %p162, %p163
      %p165 = scmp.ne.s32.totalorder %s154, %s157
      %p166 = scmp.eq.s32.totalorder %s27, 1
      %p167 = por %p165, %p166
      %p168 = scmp.ne.s32.totalorder %s157, %s158
      %p169 = scmp.eq.s32.totalorder %s27, 0
      %p170 = por %p168, %p169
      %p171 = scmp.ne.s32.totalorder %s157, %s158
      %p172 = scmp.eq.s32.totalorder %s28, 1
      %p173 = por %p171, %p172
      %p175 = scmp.ne.s32.totalorder %s158, %s174
      %p176 = scmp.eq.s32.totalorder %s28, 0
      %p177 = por %p175, %p176
      %s178 = ssub.s32 %s29, %s41
      %s179 = ssub.s32 %s30, %s37
      %s180 = sor.u32 %s178, %s179
      %p181 = scmp.eq.s32.totalorder %s180, 0
      %s183 = sadd.s32 %s182, 1
      %s184 = scalar_select %p181, %s182, %s183
      %p187 = pneg %p181
      %p188 = scmp.eq.s32.totalorder %s22, 1
      %p189 = por %p187, %p188
      %p190 = scmp.ne.s32.totalorder %s182, %s185
      %p191 = scmp.eq.s32.totalorder %s22, 0
      %p192 = por %p190, %p191
      %p193 = scmp.ne.s32.totalorder %s182, %s185
      %p194 = scmp.eq.s32.totalorder %s27, 1
      %p195 = por %p193, %p194
      %p196 = scmp.ne.s32.totalorder %s185, %s186
      %p197 = scmp.eq.s32.totalorder %s27, 0
      %p198 = por %p196, %p197
      %p199 = scmp.ne.s32.totalorder %s185, %s186
      %p200 = scmp.eq.s32.totalorder %s28, 1
      %p201 = por %p199, %p200
      %p203 = scmp.ne.s32.totalorder %s186, %s202
      %p204 = scmp.eq.s32.totalorder %s28, 0
      %p205 = por %p203, %p204
      %p206 = scmp.le.s32.totalorder 1, %s22
      %p207 = scmp.lt.s32.totalorder %s22, 3
      %p208 = pnand %p206, %p207
      %p209 = pneg %p208
      // Predicated region
      $region9: #{tpu_custom_call.1} parent=5 // pred_check
        _
      $region10: #{tpu_custom_call.1} parent=5 // pred_check_branch
        %211 = sbr.rel (%p208) target = $region12
      $region11: #{tpu_custom_call.1} parent=5 // pred_region
        %s212 = ssub.s32 %s22, 1
        // Predicated region
        $region13: #{tpu_custom_call.1} parent=11 // pred_check
          %p213 = pneg %p88
        $region14: #{tpu_custom_call.1} parent=11 // pred_check_branch
          %215 = sbr.rel (%p213) target = $region16
        $region15: #{tpu_custom_call.1} parent=11 // pred_region
          %217 = vsyncadd [#allocation6], 0
          %s218 = smul.addr %s31, 8
          %s219 = scalar_lea.hbm %s1, %s218
          %s221 = sshll.u32 %s219, 4
          %s222 = int_to_ptr.hbm [resolvable:$true] %s221
          %s223 = sshll.u32 [#allocation5], 4
          %s224 = int_to_ptr.vmem [resolvable:$true] %s223
          %226 = dma.hbm_to_vmem [thread:$0]  %s222, 128, %s224, [#allocation6]
        $region16: #{tpu_custom_call.1} parent=11 // pred_fallthru
          _
        // Predicated region
        $region17: #{tpu_custom_call.1} parent=11 // pred_check
          %p227 = pneg %p114
        $region18: #{tpu_custom_call.1} parent=11 // pred_check_branch
          %229 = sbr.rel (%p227) target = $region20
        $region19: #{tpu_custom_call.1} parent=11 // pred_region
          %231 = vsyncadd [#allocation6], 0
          %s232 = smul.addr %s31, 8
          %s233 = scalar_lea.hbm %s2, %s232
          %s235 = sshll.u32 %s233, 4
          %s236 = int_to_ptr.hbm [resolvable:$true] %s235
          %s237 = sshll.u32 [#allocation7], 4
          %s238 = int_to_ptr.vmem [resolvable:$true] %s237
          %240 = dma.hbm_to_vmem [thread:$0]  %s236, 128, %s238, [#allocation6]
        $region20: #{tpu_custom_call.1} parent=11 // pred_fallthru
          _
      $region12: #{tpu_custom_call.1} parent=5 // pred_fallthru
        _
      %p241 = scmp.lt.s32.totalorder %s22, 2
      // Predicated region
      $region21: #{tpu_custom_call.1} parent=5 // pred_check
        %p242 = pneg %p241
      $region22: #{tpu_custom_call.1} parent=5 // pred_check_branch
        %244 = sbr.rel (%p242) target = $region24
      $region23: #{tpu_custom_call.1} parent=5 // pred_region
        // Predicated region
        $region25: #{tpu_custom_call.1} parent=23 // pred_check
          %p245 = pneg %p56
        $region26: #{tpu_custom_call.1} parent=23 // pred_check_branch
          %247 = sbr.rel (%p245) target = $region28
        $region27: #{tpu_custom_call.1} parent=23 // pred_region
          %s248 = sand.u32 %s46, 1
          %s249 = scalar_lea.sflag [#allocation3], %s248
          %s250 = sand.u32 %s46, 1
          %s251 = smul.addr %s250, 8
          %s252 = scalar_lea.vmem [#allocation2], %s251
          %254 = vsyncadd %s249, 0
          %s255 = sadd.s32 %s30, %s29
          %s256 = smul.addr %s255, 8
          %s257 = scalar_lea.hbm %s0, %s256
          %s259 = sshll.u32 %s257, 4
          %s260 = int_to_ptr.hbm [resolvable:$true] %s259
          %s261 = sshll.u32 %s252, 4
          %s262 = int_to_ptr.vmem [resolvable:$true] %s261
          %264 = dma.hbm_to_vmem [thread:$0]  %s260, 128, %s262, %s249
        $region28: #{tpu_custom_call.1} parent=23 // pred_fallthru
          _
      $region24: #{tpu_custom_call.1} parent=5 // pred_fallthru
        _
      %p265 = scmp.le.s32.totalorder 1, %s22
      %p266 = scmp.lt.s32.totalorder %s22, 3
      %p267 = pnand %p265, %p266
      %p268 = pneg %p267
      // Predicated region
      $region29: #{tpu_custom_call.1} parent=5 // pred_check
        _
      $region30: #{tpu_custom_call.1} parent=5 // pred_check_branch
        %270 = sbr.rel (%p267) target = $region32
      $region31: #{tpu_custom_call.1} parent=5 // pred_region
        %s271 = ssub.s32 %s22, 1
        %s272 = sand.u32 %s49, 1
        %s273 = scalar_lea.sflag [#allocation3], %s272
        %s274 = sand.u32 %s49, 1
        %s275 = smul.addr %s274, 8
        %s276 = scalar_lea.vmem [#allocation2], %s275
        // Predicated region
        $region33: #{tpu_custom_call.1} parent=31 // pred_check
          %p277 = pneg %p62
        $region34: #{tpu_custom_call.1} parent=31 // pred_check_branch
          %279 = sbr.rel (%p277) target = $region36
        $region35: #{tpu_custom_call.1} parent=31 // pred_region
          %281 = dma.done %s273, 128
        $region36: #{tpu_custom_call.1} parent=31 // pred_fallthru
          _
        // Predicated region
        $region37: #{tpu_custom_call.1} parent=31 // pred_check
          %p282 = pneg %p88
        $region38: #{tpu_custom_call.1} parent=31 // pred_check_branch
          %284 = sbr.rel (%p282) target = $region40
        $region39: #{tpu_custom_call.1} parent=31 // pred_region
          %286 = dma.done [#allocation6], 128
        $region40: #{tpu_custom_call.1} parent=31 // pred_fallthru
          _
        // Predicated region
        $region41: #{tpu_custom_call.1} parent=31 // pred_check
          %p287 = pneg %p114
        $region42: #{tpu_custom_call.1} parent=31 // pred_check_branch
          %289 = sbr.rel (%p287) target = $region44
        $region43: #{tpu_custom_call.1} parent=31 // pred_region
          %291 = dma.done [#allocation6], 128
        $region44: #{tpu_custom_call.1} parent=31 // pred_fallthru
          _
        %s292 = sand.u32 %s49, 1
        %s293 = scalar_lea.sflag [#allocation3], %s292
        %s294 = sand.u32 %s49, 1
        %s295 = smul.addr %s294, 8
        %s296 = scalar_lea.vmem [#allocation2], %s295
        %p297 = pneg %p62
        %p298 = pneg %p59
        %p299 = pneg %p88
        %p300 = pneg %p85
        %p301 = pneg %p114
        %p302 = pneg %p111
        %p303 = pneg %p142
        %p304 = pneg %p139
        %s305 = sand.u32 %s129, 1
        %s306 = scalar_lea.sflag [#allocation4], %s305
        %s307 = sand.u32 %s129, 1
        %s308 = smul.addr %s307, 8
        %s309 = scalar_lea.vmem [#allocation8], %s308
        %p310 = pneg %p170
        %p311 = pneg %p167
        %s312 = sand.u32 %s27, 1
        %s313 = scalar_lea.sflag [#allocation10], %s312
        %s314 = sand.u32 %s157, 1
        %s315 = smul.addr %s314, 8
        %s316 = scalar_lea.vmem [#allocation9], %s315
        %p317 = pneg %p198
        %p318 = pneg %p195
        %s319 = sand.u32 %s27, 1
        %s320 = scalar_lea.sflag [#allocation10], %s319
        %s321 = sand.u32 %s185, 1
        %s322 = smul.addr %s321, 8
        %s323 = scalar_lea.vmem [#allocation11], %s322
        %v324 = vld [vmem:[%s276] sm:$0xff]
        %v325 = vmul.f32 %v324, 0.17677669
        %v326 = vld [vmem:[#allocation5] sm:$0xff]
        %v327 = vld [vmem:[#allocation7] sm:$0xff]
        %vm328 = vcmask 261120
        %v330 = vsel %vm328, %v325, 0
        %v333 = vsel %vm328, %v326, 0
        %335 = vmatpush.xpose.msra.mxu0 0.0
        %336 = vmatpush.xpose.msra.mxu0 0.0
        %337 = vmatpush.xpose.msra.mxu0 0.0
        %338 = vmatpush.xpose.msra.mxu0 0.0
        %339 = vmatpush.xpose.msra.mxu0 0.0
        %340 = vmatpush.xpose.msra.mxu0 0.0
        %341 = vmatpush.xpose.msra.mxu0 0.0
        %342 = vmatpush.xpose.msra.mxu0 0.0
        %343 = vmatpush.xpose.msra.mxu0 0.0
        %344 = vmatpush.xpose.msra.mxu0 0.0
        %345 = vmatpush.xpose.msra.mxu0 0.0
        %346 = vmatpush.xpose.msra.mxu0 0.0
        %347 = vmatpush.xpose.msra.mxu0 0.0
        %348 = vmatpush.xpose.msra.mxu0 0.0
        %349 = vmatpush.xpose.msra.mxu0 0.0
        %350 = vmatpush.xpose.msra.mxu0 %v333
        %351 = vmatmul.f32.gmra.mxu0 %v330
        %v352 = vpop.f32.mrf.mxu0
        %v353 = vadd.f32 0.0, %v352
        %354 = vdwg.mxu0
        %vm355 = vcmask 64512
        %v356 = vsel %vm355, %v353, -inf
        %357 = vmax.xlane.f32.xlu0 %v356
        %v358 = vpop.xlane.xlu0 %357
        %v359 = vsub.f32 %v353, %v358
        %v360 = vmul.f32 %v359, 1.442695
        %v361 = vpow.pop %v360
        %v362 = vsel %vm355, %v361, 0.0
        %363 = vadd.xlane.f32.xlu0 %v362
        %v364 = vpop.xlane.xlu0 %363
        %v365 = vrcp.pop %v364
        %v366 = vmul.f32 %v364, %v365
        %v367 = vsub.f32 1.0, %v366
        %v368 = vmul.f32 %v365, %v367
        %v369 = vadd.f32 %v365, %v368
        %vm370 = vweird.f32 %v364
        %vm371 = vweird.f32 %v365
        %vm372 = vmor %vm370, %vm371
        %v373 = vsel %vm372, %v365, %v369
        %v374 = vand.u32 2147483647, %v364
        %vm375 = vcmp.eq.f32.partialorder %v374, 8.507059e+37
        %v376 = vand.u32 %v364, 2147483648
        %v377 = vor.u32 1.1754944e-38, %v376
        %v378 = vsel %vm375, %v377, %v373
        %v379 = vmul.f32 %v361, %v378
        %v381 = vsel %vm355, %v379, 0
        %383 = vmatpush.msra.mxu0 0.0
        %384 = vmatpush.msra.mxu0 0.0
        %385 = vmatpush.msra.mxu0 0.0
        %386 = vmatpush.msra.mxu0 0.0
        %387 = vmatpush.msra.mxu0 0.0
        %388 = vmatpush.msra.mxu0 0.0
        %389 = vmatpush.msra.mxu0 0.0
        %390 = vmatpush.msra.mxu0 0.0
        %391 = vmatpush.msra.mxu0 0.0
        %392 = vmatpush.msra.mxu0 0.0
        %393 = vmatpush.msra.mxu0 0.0
        %394 = vmatpush.msra.mxu0 0.0
        %395 = vmatpush.msra.mxu0 0.0
        %396 = vmatpush.msra.mxu0 0.0
        %397 = vmatpush.msra.mxu0 0.0
        %398 = vmatpush.msra.mxu0 %v327
        %399 = vmatmul.f32.gmra.mxu0 %v381
        %v400 = vpop.f32.mrf.mxu0
        %v401 = vadd.f32 0.0, %v400
        %402 = vdwg.mxu0
        %403 = vst.msk [vmem:[%s323] sm:$0xff] %vm355, %v353
        %404 = vst.msk [vmem:[%s316] sm:$0xff] %vm355, %v379
        %405 = vst.msk [vmem:[%s309] sm:$0xff] %vm328, %v401
        %s406 = sand.u32 %s129, 1
        %s407 = scalar_lea.sflag [#allocation4], %s406
        %s408 = sand.u32 %s129, 1
        %s409 = smul.addr %s408, 8
        %s410 = scalar_lea.vmem [#allocation8], %s409
        %s411 = sand.u32 %s27, 1
        %s412 = scalar_lea.sflag [#allocation10], %s411
        %s413 = sand.u32 %s157, 1
        %s414 = smul.addr %s413, 8
        %s415 = scalar_lea.vmem [#allocation9], %s414
        %s416 = sand.u32 %s27, 1
        %s417 = scalar_lea.sflag [#allocation10], %s416
        %s418 = sand.u32 %s185, 1
        %s419 = smul.addr %s418, 8
        %s420 = scalar_lea.vmem [#allocation11], %s419
        // Predicated region
        $region45: #{tpu_custom_call.1} parent=31 // pred_check
          %p421 = pneg %p139
        $region46: #{tpu_custom_call.1} parent=31 // pred_check_branch
          %423 = sbr.rel (%p421) target = $region48
        $region47: #{tpu_custom_call.1} parent=31 // pred_region
          %425 = vsyncadd %s407, 0
          %s426 = sadd.s32 %s32, %s31
          %s427 = smul.addr %s426, 8
          %s428 = scalar_lea.hbm %s3, %s427
          %s430 = sshll.u32 %s410, 4
          %s431 = int_to_ptr.vmem [resolvable:$true] %s430
          %s432 = sshll.u32 %s428, 4
          %s433 = int_to_ptr.hbm [resolvable:$true] %s432
          %435 = dma.vmem_to_hbm [thread:$0]  %s431, 128, %s433, %s407
        $region48: #{tpu_custom_call.1} parent=31 // pred_fallthru
          _
        // Predicated region
        $region49: #{tpu_custom_call.1} parent=31 // pred_check
          %p436 = pneg %p167
        $region50: #{tpu_custom_call.1} parent=31 // pred_check_branch
          %438 = sbr.rel (%p436) target = $region52
        $region51: #{tpu_custom_call.1} parent=31 // pred_region
          %440 = vsyncadd %s412, 0
          %s441 = sadd.s32 %s32, %s31
          %s442 = smul.addr %s441, 8
          %s443 = scalar_lea.hbm %s4, %s442
          %s445 = sshll.u32 %s415, 4
          %s446 = int_to_ptr.vmem [resolvable:$true] %s445
          %s447 = sshll.u32 %s443, 4
          %s448 = int_to_ptr.hbm [resolvable:$true] %s447
          %450 = dma.vmem_to_hbm [thread:$0]  %s446, 128, %s448, %s412
        $region52: #{tpu_custom_call.1} parent=31 // pred_fallthru
          _
        // Predicated region
        $region53: #{tpu_custom_call.1} parent=31 // pred_check
          %p451 = pneg %p195
        $region54: #{tpu_custom_call.1} parent=31 // pred_check_branch
          %453 = sbr.rel (%p451) target = $region56
        $region55: #{tpu_custom_call.1} parent=31 // pred_region
          %455 = vsyncadd %s417, 0
          %s456 = sadd.s32 %s32, %s31
          %s457 = smul.addr %s456, 8
          %s458 = scalar_lea.hbm %s5, %s457
          %s460 = sshll.u32 %s420, 4
          %s461 = int_to_ptr.vmem [resolvable:$true] %s460
          %s462 = sshll.u32 %s458, 4
          %s463 = int_to_ptr.hbm [resolvable:$true] %s462
          %465 = dma.vmem_to_hbm [thread:$0]  %s461, 128, %s463, %s417
        $region56: #{tpu_custom_call.1} parent=31 // pred_fallthru
          _
      $region32: #{tpu_custom_call.1} parent=5 // pred_fallthru
        _
      %p466 = scmp.le.s32.totalorder 2, %s22
      // Predicated region
      $region57: #{tpu_custom_call.1} parent=5 // pred_check
        %p467 = pneg %p466
      $region58: #{tpu_custom_call.1} parent=5 // pred_check_branch
        %469 = sbr.rel (%p467) target = $region60
      $region59: #{tpu_custom_call.1} parent=5 // pred_region
        %s470 = ssub.s32 %s22, 2
        // Predicated region
        $region61: #{tpu_custom_call.1} parent=59 // pred_check
          %p471 = pneg %p145
        $region62: #{tpu_custom_call.1} parent=59 // pred_check_branch
          %473 = sbr.rel (%p471) target = $region64
        $region63: #{tpu_custom_call.1} parent=59 // pred_region
          %s474 = sand.u32 %s130, 1
          %s475 = scalar_lea.sflag [#allocation4], %s474
          %s476 = sand.u32 %s130, 1
          %s477 = smul.addr %s476, 8
          %s478 = scalar_lea.vmem [#allocation8], %s477
          %480 = dma.done %s475, 128
        $region64: #{tpu_custom_call.1} parent=59 // pred_fallthru
          _
        // Predicated region
        $region65: #{tpu_custom_call.1} parent=59 // pred_check
          %p481 = pneg %p173
        $region66: #{tpu_custom_call.1} parent=59 // pred_check_branch
          %483 = sbr.rel (%p481) target = $region68
        $region67: #{tpu_custom_call.1} parent=59 // pred_region
          %s484 = sand.u32 %s28, 1
          %s485 = scalar_lea.sflag [#allocation10], %s484
          %s486 = sand.u32 %s158, 1
          %s487 = smul.addr %s486, 8
          %s488 = scalar_lea.vmem [#allocation9], %s487
          %490 = dma.done %s485, 128
        $region68: #{tpu_custom_call.1} parent=59 // pred_fallthru
          _
        // Predicated region
        $region69: #{tpu_custom_call.1} parent=59 // pred_check
          %p491 = pneg %p201
        $region70: #{tpu_custom_call.1} parent=59 // pred_check_branch
          %493 = sbr.rel (%p491) target = $region72
        $region71: #{tpu_custom_call.1} parent=59 // pred_region
          %s494 = sand.u32 %s28, 1
          %s495 = scalar_lea.sflag [#allocation10], %s494
          %s496 = sand.u32 %s186, 1
          %s497 = smul.addr %s496, 8
          %s498 = scalar_lea.vmem [#allocation11], %s497
          %500 = dma.done %s495, 128
        $region72: #{tpu_custom_call.1} parent=59 // pred_fallthru
          _
      $region60: #{tpu_custom_call.1} parent=5 // pred_fallthru
        _
    $region6: #{tpu_custom_call.1} parent=1 // loop_footer
      %s26 = sadd.s32 1, %s22
    $region7: #{tpu_custom_call.1} parent=1 // loop_footer_branch
      %21 = sbr.rel target = $region3
    $region8: #{tpu_custom_call.1} parent=1 // loop_exit
      _
    %501 = vsyncpa [#allocation3], 1
    %s502 = scalar_lea.sflag [#allocation3], 1
    %503 = vsyncpa %s502, 1
    %504 = vsyncpa [#allocation6], 1
    %505 = vsyncpa [#allocation4], 1
    %s506 = scalar_lea.sflag [#allocation4], 1
    %507 = vsyncpa %s506, 1
    %508 = vsyncpa [#allocation10], 1
    %s509 = scalar_lea.sflag [#allocation10], 1
    %510 = vsyncpa %s509, 1

// kernel: tpu_custom_call.1
$region0: #{tpu_custom_call.1}
  #allocation0 [shape = 'u32[]', space=smem, size = 0x4, offset = 0x4, fixed_abs, tag = 'smem constant byte address 0x4 - core index']
  #allocation1 [shape = 'u32[72,128]{1,0:T(1,128)}', space=vmem, size = 0x9000, scoped, tag = 'internal scratch']
  %s0 = inlined_call_operand.hbm [shape: f32[2,8,32], index: 0, kind: input, shape index: {}]
  %s1 = inlined_call_operand.hbm [shape: f32[2,8,32], index: 1, kind: input, shape index: {}]
  %s2 = inlined_call_operand.hbm [shape: f32[2,8,32], index: 2, kind: input, shape index: {}]
  %s3 = inlined_call_operand.hbm [shape: f32[2,8,32], index: 3, kind: output, shape index: {0}]
  %s4 = inlined_call_operand.hbm [shape: f32[2,8,8], index: 4, kind: output, shape index: {1}]
  %s5 = inlined_call_operand.hbm [shape: f32[2,8,8], index: 5, kind: output, shape index: {2}]
  %6 = xla_tuple %s3, %s4, %s5
  %s7 = sld [smem:[#allocation0]]
  $region73: #{tpu_custom_call.1} parent=0
    _
  %s9 = ssub.s32 1, %s7
  %s10 = scalar_select 0, %s9, %s7
  $region1: #{tpu_custom_call.1} parent=0
    #allocation2 [shape = 'u8[8192]{0}', space=vmem, size = 0x2000, scoped, tag = 'input window, operand 0']
    #allocation3 [shape = 's32[2]{0}', space=sflag, size = 0x8, scoped, tag = 'scoped memory for tpu_custom_call.1']
    #allocation4 [shape = 's32[2]{0}', space=sflag, size = 0x8, scoped, tag = 'scoped memory for tpu_custom_call.1']
    #allocation5 [shape = 'u8[8192]{0}', space=vmem, size = 0x2000, scoped, tag = 'input window, operand 1']
    #allocation6 [shape = 's32[2]{0}', space=sflag, size = 0x8, scoped, tag = 'scoped memory for tpu_custom_call.1']
    #allocation7 [shape = 'u8[8192]{0}', space=vmem, size = 0x2000, scoped, tag = 'input window, operand 2']
    #allocation8 [shape = 'u8[8192]{0}', space=vmem, size = 0x2000, scoped, tag = 'output window, operand 0']
    #allocation9 [shape = 'u8[8192]{0}', space=vmem, size = 0x2000, scoped, tag = 'output window, operand 1']
    #allocation10 [shape = 's32[2]{0}', space=sflag, size = 0x8, scoped, tag = 'scoped memory for tpu_custom_call.1']
    #allocation11 [shape = 'u8[8192]{0}', space=vmem, size = 0x2000, scoped, tag = 'output window, operand 2']
    %11 = vsyncpa [#allocation3], 0
    %s12 = scalar_lea.sflag [#allocation3], 1
    %13 = vsyncpa %s12, 0
    %14 = vsyncpa [#allocation6], 0
    %s15 = scalar_lea.sflag [#allocation6], 1
    %16 = vsyncpa %s15, 0
    %17 = vsyncpa [#allocation4], 0
    %s18 = scalar_lea.sflag [#allocation4], 1
    %19 = vsyncpa %s18, 0
    %20 = vsyncpa [#allocation10], 0
    %s21 = scalar_lea.sflag [#allocation10], 1
    %22 = vsyncpa %s21, 0
    loop: start=0, step=1, limit=4
    $region2: #{tpu_custom_call.1} parent=1 // loop_pre_header
      _
    $region3: #{tpu_custom_call.1} parent=1 // loop_header
      %s24 = sphi 0, %s28
      %p25 = scmp.ge.s32.totalorder %s24, 4
      %s31 = sphi 0, %s43
      %s32 = sphi 0, %s39
      %s33 = sphi 0, %s31
      %s34 = sphi 0, %s32
      %s35 = sphi 0, %s33
      %s36 = sphi 0, %s34
      %s48 = sphi 0, %s50
      %s51 = sphi 0, %s48
      %s52 = sphi 0, %s51
      %s68 = sphi 0, %s52
      %s74 = sphi 0, %s76
      %s77 = sphi 0, %s74
      %s78 = sphi 0, %s77
      %s94 = sphi 0, %s78
      %s100 = sphi 0, %s102
      %s103 = sphi 0, %s100
      %s104 = sphi 0, %s103
      %s120 = sphi 0, %s104
      %s128 = sphi 0, %s130
      %s131 = sphi 0, %s128
      %s132 = sphi 0, %s131
      %s148 = sphi 0, %s132
      %s156 = sphi 0, %s158
      %s159 = sphi 0, %s156
      %s160 = sphi 0, %s159
      %s176 = sphi 0, %s160
      %s184 = sphi 0, %s186
      %s187 = sphi 0, %s184
      %s188 = sphi 0, %s187
      %s204 = sphi 0, %s188
    $region4: #{tpu_custom_call.1} parent=1 // loop_header_branch
      %27 = sbr.rel (%p25) target = $region8
    $region5: #{tpu_custom_call.1} parent=1 // loop_body
      %s29 = ssub.s32 %s24, 1
      %s30 = ssub.s32 %s24, 2
      %s37 = sadd.s32 1, %s32
      %p38 = scmp.ge.s32.totalorder %s37, 1
      %s39 = scalar_select %p38, 0, %s37
      %s40 = sadd.s32 1, %s31
      %s41 = scalar_select %p38, %s40, %s31
      %p42 = scmp.ge.s32.totalorder %s41, 2
      %s43 = scalar_select %p42, 0, %s41
      %s44 = ssub.s32 %s31, %s43
      %s45 = ssub.s32 %s32, %s39
      %s46 = sor.u32 %s44, %s45
      %p47 = scmp.eq.s32.totalorder %s46, 0
      %s49 = sadd.s32 %s48, 1
      %s50 = scalar_select %p47, %s48, %s49
      %p53 = pneg %p47
      %p54 = scmp.eq.s32.totalorder %s24, 1
      %p55 = por %p53, %p54
      %p56 = scmp.ne.s32.totalorder %s48, %s51
      %p57 = scmp.eq.s32.totalorder %s24, 0
      %p58 = por %p56, %p57
      %p59 = scmp.ne.s32.totalorder %s48, %s51
      %p60 = scmp.eq.s32.totalorder %s29, 1
      %p61 = por %p59, %p60
      %p62 = scmp.ne.s32.totalorder %s51, %s52
      %p63 = scmp.eq.s32.totalorder %s29, 0
      %p64 = por %p62, %p63
      %p65 = scmp.ne.s32.totalorder %s51, %s52
      %p66 = scmp.eq.s32.totalorder %s30, 1
      %p67 = por %p65, %p66
      %p69 = scmp.ne.s32.totalorder %s52, %s68
      %p70 = scmp.eq.s32.totalorder %s30, 0
      %p71 = por %p69, %p70
      %s72 = ssub.s32 %s31, %s43
      %p73 = scmp.eq.s32.totalorder %s72, 0
      %s75 = sadd.s32 %s74, 1
      %s76 = scalar_select %p73, %s74, %s75
      %p79 = pneg %p73
      %p80 = scmp.eq.s32.totalorder %s24, 1
      %p81 = por %p79, %p80
      %p82 = scmp.ne.s32.totalorder %s74, %s77
      %p83 = scmp.eq.s32.totalorder %s24, 0
      %p84 = por %p82, %p83
      %p85 = scmp.ne.s32.totalorder %s74, %s77
      %p86 = scmp.eq.s32.totalorder %s29, 1
      %p87 = por %p85, %p86
      %p88 = scmp.ne.s32.totalorder %s77, %s78
      %p89 = scmp.eq.s32.totalorder %s29, 0
      %p90 = por %p88, %p89
      %p91 = scmp.ne.s32.totalorder %s77, %s78
      %p92 = scmp.eq.s32.totalorder %s30, 1
      %p93 = por %p91, %p92
      %p95 = scmp.ne.s32.totalorder %s78, %s94
      %p96 = scmp.eq.s32.totalorder %s30, 0
      %p97 = por %p95, %p96
      %s98 = ssub.s32 %s31, %s43
      %p99 = scmp.eq.s32.totalorder %s98, 0
      %s101 = sadd.s32 %s100, 1
      %s102 = scalar_select %p99, %s100, %s101
      %p105 = pneg %p99
      %p106 = scmp.eq.s32.totalorder %s24, 1
      %p107 = por %p105, %p106
      %p108 = scmp.ne.s32.totalorder %s100, %s103
      %p109 = scmp.eq.s32.totalorder %s24, 0
      %p110 = por %p108, %p109
      %p111 = scmp.ne.s32.totalorder %s100, %s103
      %p112 = scmp.eq.s32.totalorder %s29, 1
      %p113 = por %p111, %p112
      %p114 = scmp.ne.s32.totalorder %s103, %s104
      %p115 = scmp.eq.s32.totalorder %s29, 0
      %p116 = por %p114, %p115
      %p117 = scmp.ne.s32.totalorder %s103, %s104
      %p118 = scmp.eq.s32.totalorder %s30, 1
      %p119 = por %p117, %p118
      %p121 = scmp.ne.s32.totalorder %s104, %s120
      %p122 = scmp.eq.s32.totalorder %s30, 0
      %p123 = por %p121, %p122
      %s124 = ssub.s32 %s31, %s43
      %s125 = ssub.s32 %s32, %s39
      %s126 = sor.u32 %s124, %s125
      %p127 = scmp.eq.s32.totalorder %s126, 0
      %s129 = sadd.s32 %s128, 1
      %s130 = scalar_select %p127, %s128, %s129
      %p133 = pneg %p127
      %p134 = scmp.eq.s32.totalorder %s24, 1
      %p135 = por %p133, %p134
      %p136 = scmp.ne.s32.totalorder %s128, %s131
      %p137 = scmp.eq.s32.totalorder %s24, 0
      %p138 = por %p136, %p137
      %p139 = scmp.ne.s32.totalorder %s128, %s131
      %p140 = scmp.eq.s32.totalorder %s29, 1
      %p141 = por %p139, %p140
      %p142 = scmp.ne.s32.totalorder %s131, %s132
      %p143 = scmp.eq.s32.totalorder %s29, 0
      %p144 = por %p142, %p143
      %p145 = scmp.ne.s32.totalorder %s131, %s132
      %p146 = scmp.eq.s32.totalorder %s30, 1
      %p147 = por %p145, %p146
      %p149 = scmp.ne.s32.totalorder %s132, %s148
      %p150 = scmp.eq.s32.totalorder %s30, 0
      %p151 = por %p149, %p150
      %s152 = ssub.s32 %s31, %s43
      %s153 = ssub.s32 %s32, %s39
      %s154 = sor.u32 %s152, %s153
      %p155 = scmp.eq.s32.totalorder %s154, 0
      %s157 = sadd.s32 %s156, 1
      %s158 = scalar_select %p155, %s156, %s157
      %p161 = pneg %p155
      %p162 = scmp.eq.s32.totalorder %s24, 1
      %p163 = por %p161, %p162
      %p164 = scmp.ne.s32.totalorder %s156, %s159
      %p165 = scmp.eq.s32.totalorder %s24, 0
      %p166 = por %p164, %p165
      %p167 = scmp.ne.s32.totalorder %s156, %s159
      %p168 = scmp.eq.s32.totalorder %s29, 1
      %p169 = por %p167, %p168
      %p170 = scmp.ne.s32.totalorder %s159, %s160
      %p171 = scmp.eq.s32.totalorder %s29, 0
      %p172 = por %p170, %p171
      %p173 = scmp.ne.s32.totalorder %s159, %s160
      %p174 = scmp.eq.s32.totalorder %s30, 1
      %p175 = por %p173, %p174
      %p177 = scmp.ne.s32.totalorder %s160, %s176
      %p178 = scmp.eq.s32.totalorder %s30, 0
      %p179 = por %p177, %p178
      %s180 = ssub.s32 %s31, %s43
      %s181 = ssub.s32 %s32, %s39
      %s182 = sor.u32 %s180, %s181
      %p183 = scmp.eq.s32.totalorder %s182, 0
      %s185 = sadd.s32 %s184, 1
      %s186 = scalar_select %p183, %s184, %s185
      %p189 = pneg %p183
      %p190 = scmp.eq.s32.totalorder %s24, 1
      %p191 = por %p189, %p190
      %p192 = scmp.ne.s32.totalorder %s184, %s187
      %p193 = scmp.eq.s32.totalorder %s24, 0
      %p194 = por %p192, %p193
      %p195 = scmp.ne.s32.totalorder %s184, %s187
      %p196 = scmp.eq.s32.totalorder %s29, 1
      %p197 = por %p195, %p196
      %p198 = scmp.ne.s32.totalorder %s187, %s188
      %p199 = scmp.eq.s32.totalorder %s29, 0
      %p200 = por %p198, %p199
      %p201 = scmp.ne.s32.totalorder %s187, %s188
      %p202 = scmp.eq.s32.totalorder %s30, 1
      %p203 = por %p201, %p202
      %p205 = scmp.ne.s32.totalorder %s188, %s204
      %p206 = scmp.eq.s32.totalorder %s30, 0
      %p207 = por %p205, %p206
      %p208 = scmp.le.s32.totalorder 1, %s24
      %p209 = scmp.lt.s32.totalorder %s24, 3
      %p210 = pnand %p208, %p209
      %p211 = pneg %p210
      // Predicated region
      $region9: #{tpu_custom_call.1} parent=5 // pred_check
        _
      $region10: #{tpu_custom_call.1} parent=5 // pred_check_branch
        %213 = sbr.rel (%p210) target = $region12
      $region11: #{tpu_custom_call.1} parent=5 // pred_region
        %s214 = ssub.s32 %s24, 1
      $region12: #{tpu_custom_call.1} parent=5 // pred_fallthru
        _
      %p215 = scmp.lt.s32.totalorder %s24, 2
      // Predicated region
      $region13: #{tpu_custom_call.1} parent=5 // pred_check
        %p216 = pneg %p215
      $region14: #{tpu_custom_call.1} parent=5 // pred_check_branch
        %218 = sbr.rel (%p216) target = $region16
      $region15: #{tpu_custom_call.1} parent=5 // pred_region
        // Predicated region
        $region17: #{tpu_custom_call.1} parent=15 // pred_check
          %p219 = pneg %p58
        $region18: #{tpu_custom_call.1} parent=15 // pred_check_branch
          %221 = sbr.rel (%p219) target = $region20
        $region19: #{tpu_custom_call.1} parent=15 // pred_region
          %s222 = sand.u32 %s48, 1
          %s223 = scalar_lea.sflag [#allocation3], %s222
          %s224 = sand.u32 %s48, 1
          %s225 = smul.addr %s224, 8
          %s226 = scalar_lea.vmem [#allocation2], %s225
          %228 = vsyncadd %s223, 0
          %s229 = sadd.s32 %s32, %s31
          %s230 = smul.addr %s229, 8
          %s231 = scalar_lea.hbm %s0, %s230
          %s233 = sshll.u32 %s231, 4
          %s234 = int_to_ptr.hbm [resolvable:$true] %s233
          %s235 = sshll.u32 %s226, 4
          %s236 = int_to_ptr.vmem [resolvable:$true] %s235
          %238 = dma.hbm_to_vmem [thread:$0]  %s234, 128, %s236, %s223
        $region20: #{tpu_custom_call.1} parent=15 // pred_fallthru
          _
        // Predicated region
        $region21: #{tpu_custom_call.1} parent=15 // pred_check
          %p239 = pneg %p84
        $region22: #{tpu_custom_call.1} parent=15 // pred_check_branch
          %241 = sbr.rel (%p239) target = $region24
        $region23: #{tpu_custom_call.1} parent=15 // pred_region
          %s242 = sand.u32 %s24, 1
          %s243 = scalar_lea.sflag [#allocation6], %s242
          %s244 = sand.u32 %s74, 1
          %s245 = smul.addr %s244, 8
          %s246 = scalar_lea.vmem [#allocation5], %s245
          %248 = vsyncadd %s243, 0
          %s249 = smul.addr %s31, 8
          %s250 = scalar_lea.hbm %s1, %s249
          %s252 = sshll.u32 %s250, 4
          %s253 = int_to_ptr.hbm [resolvable:$true] %s252
          %s254 = sshll.u32 %s246, 4
          %s255 = int_to_ptr.vmem [resolvable:$true] %s254
          %257 = dma.hbm_to_vmem [thread:$0]  %s253, 128, %s255, %s243
        $region24: #{tpu_custom_call.1} parent=15 // pred_fallthru
          _
        // Predicated region
        $region25: #{tpu_custom_call.1} parent=15 // pred_check
          %p258 = pneg %p110
        $region26: #{tpu_custom_call.1} parent=15 // pred_check_branch
          %260 = sbr.rel (%p258) target = $region28
        $region27: #{tpu_custom_call.1} parent=15 // pred_region
          %s261 = sand.u32 %s24, 1
          %s262 = scalar_lea.sflag [#allocation6], %s261
          %s263 = sand.u32 %s100, 1
          %s264 = smul.addr %s263, 8
          %s265 = scalar_lea.vmem [#allocation7], %s264
          %267 = vsyncadd %s262, 0
          %s268 = smul.addr %s31, 8
          %s269 = scalar_lea.hbm %s2, %s268
          %s271 = sshll.u32 %s269, 4
          %s272 = int_to_ptr.hbm [resolvable:$true] %s271
          %s273 = sshll.u32 %s265, 4
          %s274 = int_to_ptr.vmem [resolvable:$true] %s273
          %276 = dma.hbm_to_vmem [thread:$0]  %s272, 128, %s274, %s262
        $region28: #{tpu_custom_call.1} parent=15 // pred_fallthru
          _
      $region16: #{tpu_custom_call.1} parent=5 // pred_fallthru
        _
      %p277 = scmp.le.s32.totalorder 1, %s24
      %p278 = scmp.lt.s32.totalorder %s24, 3
      %p279 = pnand %p277, %p278
      %p280 = pneg %p279
      // Predicated region
      $region29: #{tpu_custom_call.1} parent=5 // pred_check
        _
      $region30: #{tpu_custom_call.1} parent=5 // pred_check_branch
        %282 = sbr.rel (%p279) target = $region32
      $region31: #{tpu_custom_call.1} parent=5 // pred_region
        %s283 = ssub.s32 %s24, 1
        %s284 = sand.u32 %s51, 1
        %s285 = scalar_lea.sflag [#allocation3], %s284
        %s286 = sand.u32 %s51, 1
        %s287 = smul.addr %s286, 8
        %s288 = scalar_lea.vmem [#allocation2], %s287
        // Predicated region
        $region33: #{tpu_custom_call.1} parent=31 // pred_check
          %p289 = pneg %p64
        $region34: #{tpu_custom_call.1} parent=31 // pred_check_branch
          %291 = sbr.rel (%p289) target = $region36
        $region35: #{tpu_custom_call.1} parent=31 // pred_region
          %293 = dma.done %s285, 128
        $region36: #{tpu_custom_call.1} parent=31 // pred_fallthru
          _
        %s294 = sand.u32 %s29, 1
        %s295 = scalar_lea.sflag [#allocation6], %s294
        %s296 = sand.u32 %s77, 1
        %s297 = smul.addr %s296, 8
        %s298 = scalar_lea.vmem [#allocation5], %s297
        // Predicated region
        $region37: #{tpu_custom_call.1} parent=31 // pred_check
          %p299 = pneg %p90
        $region38: #{tpu_custom_call.1} parent=31 // pred_check_branch
          %301 = sbr.rel (%p299) target = $region40
        $region39: #{tpu_custom_call.1} parent=31 // pred_region
          %303 = dma.done %s295, 128
        $region40: #{tpu_custom_call.1} parent=31 // pred_fallthru
          _
        %s304 = sand.u32 %s29, 1
        %s305 = scalar_lea.sflag [#allocation6], %s304
        %s306 = sand.u32 %s103, 1
        %s307 = smul.addr %s306, 8
        %s308 = scalar_lea.vmem [#allocation7], %s307
        // Predicated region
        $region41: #{tpu_custom_call.1} parent=31 // pred_check
          %p309 = pneg %p116
        $region42: #{tpu_custom_call.1} parent=31 // pred_check_branch
          %311 = sbr.rel (%p309) target = $region44
        $region43: #{tpu_custom_call.1} parent=31 // pred_region
          %313 = dma.done %s305, 128
        $region44: #{tpu_custom_call.1} parent=31 // pred_fallthru
          _
        %s314 = sand.u32 %s51, 1
        %s315 = scalar_lea.sflag [#allocation3], %s314
        %s316 = sand.u32 %s51, 1
        %s317 = smul.addr %s316, 8
        %s318 = scalar_lea.vmem [#allocation2], %s317
        %p319 = pneg %p64
        %p320 = pneg %p61
        %s321 = sand.u32 %s29, 1
        %s322 = scalar_lea.sflag [#allocation6], %s321
        %s323 = sand.u32 %s77, 1
        %s324 = smul.addr %s323, 8
        %s325 = scalar_lea.vmem [#allocation5], %s324
        %p326 = pneg %p90
        %p327 = pneg %p87
        %s328 = sand.u32 %s29, 1
        %s329 = scalar_lea.sflag [#allocation6], %s328
        %s330 = sand.u32 %s103, 1
        %s331 = smul.addr %s330, 8
        %s332 = scalar_lea.vmem [#allocation7], %s331
        %p333 = pneg %p116
        %p334 = pneg %p113
        %p335 = pneg %p144
        %p336 = pneg %p141
        %s337 = sand.u32 %s131, 1
        %s338 = scalar_lea.sflag [#allocation4], %s337
        %s339 = sand.u32 %s131, 1
        %s340 = smul.addr %s339, 8
        %s341 = scalar_lea.vmem [#allocation8], %s340
        %p342 = pneg %p172
        %p343 = pneg %p169
        %s344 = sand.u32 %s29, 1
        %s345 = scalar_lea.sflag [#allocation10], %s344
        %s346 = sand.u32 %s159, 1
        %s347 = smul.addr %s346, 8
        %s348 = scalar_lea.vmem [#allocation9], %s347
        %p349 = pneg %p200
        %p350 = pneg %p197
        %s351 = sand.u32 %s29, 1
        %s352 = scalar_lea.sflag [#allocation10], %s351
        %s353 = sand.u32 %s187, 1
        %s354 = smul.addr %s353, 8
        %s355 = scalar_lea.vmem [#allocation11], %s354
        %v356 = vld [vmem:[%s288] sm:$0xff]
        %v357 = vmul.f32 %v356, 0.17677669
        %v358 = vld [vmem:[%s298] sm:$0xff]
        %v359 = vld [vmem:[%s308] sm:$0xff]
        %vm360 = vcmask 261120
        %v362 = vsel %vm360, %v357, 0
        %v365 = vsel %vm360, %v358, 0
        %367 = vmatpush.xpose.msra.mxu0 0.0
        %368 = vmatpush.xpose.msra.mxu0 0.0
        %369 = vmatpush.xpose.msra.mxu0 0.0
        %370 = vmatpush.xpose.msra.mxu0 0.0
        %371 = vmatpush.xpose.msra.mxu0 0.0
        %372 = vmatpush.xpose.msra.mxu0 0.0
        %373 = vmatpush.xpose.msra.mxu0 0.0
        %374 = vmatpush.xpose.msra.mxu0 0.0
        %375 = vmatpush.xpose.msra.mxu0 0.0
        %376 = vmatpush.xpose.msra.mxu0 0.0
        %377 = vmatpush.xpose.msra.mxu0 0.0
        %378 = vmatpush.xpose.msra.mxu0 0.0
        %379 = vmatpush.xpose.msra.mxu0 0.0
        %380 = vmatpush.xpose.msra.mxu0 0.0
        %381 = vmatpush.xpose.msra.mxu0 0.0
        %382 = vmatpush.xpose.msra.mxu0 %v365
        %383 = vmatmul.f32.gmra.mxu0 %v362
        %v384 = vpop.f32.mrf.mxu0
        %v385 = vadd.f32 0.0, %v384
        %386 = vdwg.mxu0
        %vm387 = vcmask 64512
        %v388 = vsel %vm387, %v385, -inf
        %389 = vmax.xlane.f32.xlu0 %v388
        %v390 = vpop.xlane.xlu0 %389
        %v391 = vsub.f32 %v385, %v390
        %v392 = vmul.f32 %v391, 1.442695
        %v393 = vpow.pop %v392
        %v394 = vsel %vm387, %v393, 0.0
        %395 = vadd.xlane.f32.xlu0 %v394
        %v396 = vpop.xlane.xlu0 %395
        %v397 = vrcp.pop %v396
        %v398 = vmul.f32 %v396, %v397
        %v399 = vsub.f32 1.0, %v398
        %v400 = vmul.f32 %v397, %v399
        %v401 = vadd.f32 %v397, %v400
        %vm402 = vweird.f32 %v396
        %vm403 = vweird.f32 %v397
        %vm404 = vmor %vm402, %vm403
        %v405 = vsel %vm404, %v397, %v401
        %v406 = vand.u32 2147483647, %v396
        %vm407 = vcmp.eq.f32.partialorder %v406, 8.507059e+37
        %v408 = vand.u32 %v396, 2147483648
        %v409 = vor.u32 1.1754944e-38, %v408
        %v410 = vsel %vm407, %v409, %v405
        %v411 = vmul.f32 %v393, %v410
        %v413 = vsel %vm387, %v411, 0
        %415 = vmatpush.msra.mxu0 0.0
        %416 = vmatpush.msra.mxu0 0.0
        %417 = vmatpush.msra.mxu0 0.0
        %418 = vmatpush.msra.mxu0 0.0
        %419 = vmatpush.msra.mxu0 0.0
        %420 = vmatpush.msra.mxu0 0.0
        %421 = vmatpush.msra.mxu0 0.0
        %422 = vmatpush.msra.mxu0 0.0
        %423 = vmatpush.msra.mxu0 0.0
        %424 = vmatpush.msra.mxu0 0.0
        %425 = vmatpush.msra.mxu0 0.0
        %426 = vmatpush.msra.mxu0 0.0
        %427 = vmatpush.msra.mxu0 0.0
        %428 = vmatpush.msra.mxu0 0.0
        %429 = vmatpush.msra.mxu0 0.0
        %430 = vmatpush.msra.mxu0 %v359
        %431 = vmatmul.f32.gmra.mxu0 %v413
        %v432 = vpop.f32.mrf.mxu0
        %v433 = vadd.f32 0.0, %v432
        %434 = vdwg.mxu0
        %435 = vst.msk [vmem:[%s355] sm:$0xff] %vm387, %v385
        %436 = vst.msk [vmem:[%s348] sm:$0xff] %vm387, %v411
        %437 = vst.msk [vmem:[%s341] sm:$0xff] %vm360, %v433
        %s438 = sand.u32 %s131, 1
        %s439 = scalar_lea.sflag [#allocation4], %s438
        %s440 = sand.u32 %s131, 1
        %s441 = smul.addr %s440, 8
        %s442 = scalar_lea.vmem [#allocation8], %s441
        %s443 = sand.u32 %s29, 1
        %s444 = scalar_lea.sflag [#allocation10], %s443
        %s445 = sand.u32 %s159, 1
        %s446 = smul.addr %s445, 8
        %s447 = scalar_lea.vmem [#allocation9], %s446
        %s448 = sand.u32 %s29, 1
        %s449 = scalar_lea.sflag [#allocation10], %s448
        %s450 = sand.u32 %s187, 1
        %s451 = smul.addr %s450, 8
        %s452 = scalar_lea.vmem [#allocation11], %s451
        // Predicated region
        $region45: #{tpu_custom_call.1} parent=31 // pred_check
          %p453 = pneg %p141
        $region46: #{tpu_custom_call.1} parent=31 // pred_check_branch
          %455 = sbr.rel (%p453) target = $region48
        $region47: #{tpu_custom_call.1} parent=31 // pred_region
          %457 = vsyncadd %s439, 0
          %s458 = sadd.s32 %s34, %s33
          %s459 = smul.addr %s458, 8
          %s460 = scalar_lea.hbm %s3, %s459
          %s462 = sshll.u32 %s442, 4
          %s463 = int_to_ptr.vmem [resolvable:$true] %s462
          %s464 = sshll.u32 %s460, 4
          %s465 = int_to_ptr.hbm [resolvable:$true] %s464
          %467 = dma.vmem_to_hbm [thread:$0]  %s463, 128, %s465, %s439
        $region48: #{tpu_custom_call.1} parent=31 // pred_fallthru
          _
        // Predicated region
        $region49: #{tpu_custom_call.1} parent=31 // pred_check
          %p468 = pneg %p169
        $region50: #{tpu_custom_call.1} parent=31 // pred_check_branch
          %470 = sbr.rel (%p468) target = $region52
        $region51: #{tpu_custom_call.1} parent=31 // pred_region
          %472 = vsyncadd %s444, 0
          %s473 = sadd.s32 %s34, %s33
          %s474 = smul.addr %s473, 8
          %s475 = scalar_lea.hbm %s4, %s474
          %s477 = sshll.u32 %s447, 4
          %s478 = int_to_ptr.vmem [resolvable:$true] %s477
          %s479 = sshll.u32 %s475, 4
          %s480 = int_to_ptr.hbm [resolvable:$true] %s479
          %482 = dma.vmem_to_hbm [thread:$0]  %s478, 128, %s480, %s444
        $region52: #{tpu_custom_call.1} parent=31 // pred_fallthru
          _
        // Predicated region
        $region53: #{tpu_custom_call.1} parent=31 // pred_check
          %p483 = pneg %p197
        $region54: #{tpu_custom_call.1} parent=31 // pred_check_branch
          %485 = sbr.rel (%p483) target = $region56
        $region55: #{tpu_custom_call.1} parent=31 // pred_region
          %487 = vsyncadd %s449, 0
          %s488 = sadd.s32 %s34, %s33
          %s489 = smul.addr %s488, 8
          %s490 = scalar_lea.hbm %s5, %s489
          %s492 = sshll.u32 %s452, 4
          %s493 = int_to_ptr.vmem [resolvable:$true] %s492
          %s494 = sshll.u32 %s490, 4
          %s495 = int_to_ptr.hbm [resolvable:$true] %s494
          %497 = dma.vmem_to_hbm [thread:$0]  %s493, 128, %s495, %s449
        $region56: #{tpu_custom_call.1} parent=31 // pred_fallthru
          _
      $region32: #{tpu_custom_call.1} parent=5 // pred_fallthru
        _
      %p498 = scmp.le.s32.totalorder 2, %s24
      // Predicated region
      $region57: #{tpu_custom_call.1} parent=5 // pred_check
        %p499 = pneg %p498
      $region58: #{tpu_custom_call.1} parent=5 // pred_check_branch
        %501 = sbr.rel (%p499) target = $region60
      $region59: #{tpu_custom_call.1} parent=5 // pred_region
        %s502 = ssub.s32 %s24, 2
        // Predicated region
        $region61: #{tpu_custom_call.1} parent=59 // pred_check
          %p503 = pneg %p147
        $region62: #{tpu_custom_call.1} parent=59 // pred_check_branch
          %505 = sbr.rel (%p503) target = $region64
        $region63: #{tpu_custom_call.1} parent=59 // pred_region
          %s506 = sand.u32 %s132, 1
          %s507 = scalar_lea.sflag [#allocation4], %s506
          %s508 = sand.u32 %s132, 1
          %s509 = smul.addr %s508, 8
          %s510 = scalar_lea.vmem [#allocation8], %s509
          %512 = dma.done %s507, 128
        $region64: #{tpu_custom_call.1} parent=59 // pred_fallthru
          _
        // Predicated region
        $region65: #{tpu_custom_call.1} parent=59 // pred_check
          %p513 = pneg %p175
        $region66: #{tpu_custom_call.1} parent=59 // pred_check_branch
          %515 = sbr.rel (%p513) target = $region68
        $region67: #{tpu_custom_call.1} parent=59 // pred_region
          %s516 = sand.u32 %s30, 1
          %s517 = scalar_lea.sflag [#allocation10], %s516
          %s518 = sand.u32 %s160, 1
          %s519 = smul.addr %s518, 8
          %s520 = scalar_lea.vmem [#allocation9], %s519
          %522 = dma.done %s517, 128
        $region68: #{tpu_custom_call.1} parent=59 // pred_fallthru
          _
        // Predicated region
        $region69: #{tpu_custom_call.1} parent=59 // pred_check
          %p523 = pneg %p203
        $region70: #{tpu_custom_call.1} parent=59 // pred_check_branch
          %525 = sbr.rel (%p523) target = $region72
        $region71: #{tpu_custom_call.1} parent=59 // pred_region
          %s526 = sand.u32 %s30, 1
          %s527 = scalar_lea.sflag [#allocation10], %s526
          %s528 = sand.u32 %s188, 1
          %s529 = smul.addr %s528, 8
          %s530 = scalar_lea.vmem [#allocation11], %s529
          %532 = dma.done %s527, 128
        $region72: #{tpu_custom_call.1} parent=59 // pred_fallthru
          _
      $region60: #{tpu_custom_call.1} parent=5 // pred_fallthru
        _
    $region6: #{tpu_custom_call.1} parent=1 // loop_footer
      %s28 = sadd.s32 1, %s24
    $region7: #{tpu_custom_call.1} parent=1 // loop_footer_branch
      %23 = sbr.rel target = $region3
    $region8: #{tpu_custom_call.1} parent=1 // loop_exit
      _
    %533 = vsyncpa [#allocation3], 1
    %s534 = scalar_lea.sflag [#allocation3], 1
    %535 = vsyncpa %s534, 1
    %536 = vsyncpa [#allocation6], 1
    %s537 = scalar_lea.sflag [#allocation6], 1
    %538 = vsyncpa %s537, 1
    %539 = vsyncpa [#allocation4], 1
    %s540 = scalar_lea.sflag [#allocation4], 1
    %541 = vsyncpa %s540, 1
    %542 = vsyncpa [#allocation10], 1
    %s543 = scalar_lea.sflag [#allocation10], 1
    %544 = vsyncpa %s543, 1

</llo_original>
